<compile_context>
chip_gen: v7x
topology: tpu7x:2x2x1
jax: 0.10.0
libtpu: 0.0.40
codegen_flags: <defaults>
</compile_context>

<pallas_src>
import jax
import jax.numpy as jnp
from jax.experimental import pallas as pl
from jax.experimental.pallas import tpu as pltpu


def _round_up(x, m):
    return (x + m - 1) // m * m


def make_mlp_kernel(num_layers, d_out):
    def mlp_kernel(x_ref, w_ref, b_ref, o_ref):
        # x_ref: [F, bt]      transposed, zero-padded activations (batch on lanes)
        # w_ref: [L, F, F]    zero-padded weights, PyTorch [out, in] layout
        # b_ref: [L, F, 1]    zero-padded biases (broadcast over lanes)
        # o_ref: [d_out, bt]  lane-dense output slab
        h = x_ref[...]
        for l in range(num_layers - 1):
            z = jnp.dot(w_ref[l], h, preferred_element_type=jnp.float32) + b_ref[l]
            h = jax.nn.sigmoid(z)
        y = jnp.dot(w_ref[num_layers - 1], h,
                    preferred_element_type=jnp.float32) + b_ref[num_layers - 1]
        # Only the first d_out rows are real; store is lane-dense along batch.
        o_ref[...] = y[:d_out, :].astype(o_ref.dtype)

    return mlp_kernel


def pack_params(params, feat):
    """Pack PyTorch-layout params [(W [out,in], b [out]), ...] into two
    zero-padded slabs: W_slab [L, feat, feat], b_slab [L, feat, 1]."""
    num_layers = len(params)
    w_slab = jnp.zeros((num_layers, feat, feat), jnp.float32)
    b_slab = jnp.zeros((num_layers, feat, 1), jnp.float32)
    for l, (w, b) in enumerate(params):
        o, i = w.shape
        w_slab = w_slab.at[l, :o, :i].set(w.astype(jnp.float32))
        b_slab = b_slab.at[l, :o, 0].set(b.astype(jnp.float32))
    return w_slab, b_slab


def mlp_forward(x, params, *, batch_tile=1024):
    """x: [N, D_in] float32.  params: list of (W [out,in], b [out]) in
    PyTorch Linear layout.  Returns [N, D_out]."""
    n, d_in = x.shape
    d_out = params[-1][0].shape[0]
    num_layers = len(params)

    # Common padded feature width (sublane-aligned).
    dims = [d_in] + [w.shape[0] for w, _ in params]
    feat = max(8, _round_up(max(dims), 8))

    # Batch tiling: lane-aligned tiles, clamp for small N (single grid step
    # for the demo), remainder handled by zero padding + slicing.
    bt = min(_round_up(batch_tile, 128), _round_up(n, 128))
    n_pad = _round_up(n, bt)
    n_steps = n_pad // bt

    w_slab, b_slab = pack_params(params, feat)

    # Transposed, zero-padded input: [feat, n_pad], batch on lanes.
    x_t = jnp.zeros((feat, n_pad), jnp.float32)
    x_t = x_t.at[:d_in, :n].set(x.T.astype(jnp.float32))

    kernel = make_mlp_kernel(num_layers, d_out)

    out_t = pl.pallas_call(
        kernel,
        out_shape=jax.ShapeDtypeStruct((d_out, n_pad), jnp.float32),
        grid_spec=pltpu.PrefetchScalarGridSpec(
            num_scalar_prefetch=0,
            grid=(n_steps,),
            in_specs=[
                # Activations: tile the batch (lane) axis only.
                pl.BlockSpec((feat, bt), lambda i: (0, i)),
                # Parameter slabs: full-extent, VMEM-resident every step.
                pl.BlockSpec((num_layers, feat, feat), lambda i: (0, 0, 0)),
                pl.BlockSpec((num_layers, feat, 1), lambda i: (0, 0, 0)),
            ],
            out_specs=pl.BlockSpec((d_out, bt), lambda i: (0, i)),
        ),
        compiler_params=pltpu.CompilerParams(
            dimension_semantics=("parallel",)),
    )(x_t, w_slab, b_slab)

    # Back to the PyTorch-facing [N, D_out] layout.
    return out_t[:, :n].T


def init_params(key, dims):
    """PyTorch-style Linear init: U(-1/sqrt(fan_in), 1/sqrt(fan_in)).
    Returns list of (W [out, in], b [out])."""
    params = []
    for d_in, d_out in zip(dims[:-1], dims[1:]):
        key, kw, kb = jax.random.split(key, 3)
        bound = 1.0 / jnp.sqrt(jnp.float32(d_in))
        w = jax.random.uniform(kw, (d_out, d_in), jnp.float32, -bound, bound)
        b = jax.random.uniform(kb, (d_out,), jnp.float32, -bound, bound)
        params.append((w, b))
    return params


def mlp_reference(x, params):
    h = x
    for i, (w, b) in enumerate(params):
        h = h @ w.T + b
        if i < len(params) - 1:
            h = jax.nn.sigmoid(h)
    return h


if __name__ == "__main__":
    # California-housing style MLP: D_in=8 features, 1 regression output.
    D_in, H1, H2, H3, H4, D_out = 8, 32, 32, 16, 16, 1
    N = 64  # small demo batch; exercises the padding / single-grid-step path

    key = jax.random.PRNGKey(0)
    key, kx = jax.random.split(key)
    x = jax.random.normal(kx, (N, D_in), jnp.float32)

    params = init_params(key, (D_in, H1, H2, H3, H4, D_out))

    y = mlp_forward(x, params, batch_tile=1024)
    y = jax.block_until_ready(y)

    y_ref = mlp_reference(x, params)
    assert y.shape == (N, D_out)
    assert jnp.allclose(y, y_ref, atol=1e-4, rtol=1e-4), "mismatch vs reference"

    print("KERNEL_OK")
</pallas_src>

<mosaic_0001>
module attributes {stable_mosaic.version = 11 : i64} {
  func.func @mlp_kernel(%arg0: i32, %arg1: memref<32x128xf32, #tpu.memory_space<vmem>>, %arg2: memref<5x32x32xf32, #tpu.memory_space<vmem>>, %arg3: memref<5x32x1xf32, #tpu.memory_space<vmem>>, %arg4: memref<1x128xf32, #tpu.memory_space<vmem>>) attributes {dimension_semantics = [#tpu.dimension_semantics<parallel>], iteration_bounds = array<i64: 1>, scalar_prefetch = 0 : i64, scratch_operands = 0 : i64, tpu.core_type = #tpu.core_type<tc>, window_params = [{transform_indices = @transform_0, window_bounds = array<i64: 32, 128>}, {pipeline_mode = #tpu.pipeline_mode<synchronous>, transform_indices = @transform_1, window_bounds = array<i64: 5, 32, 32>}, {pipeline_mode = #tpu.pipeline_mode<synchronous>, transform_indices = @transform_2, window_bounds = array<i64: 5, 32, 1>}, {transform_indices = @transform_3, window_bounds = array<i64: 1, 128>}]} {
    %c0 = arith.constant 0 : index
    %c0_0 = arith.constant 0 : index
    %0 = vector.load %arg1[%c0, %c0_0] : memref<32x128xf32, #tpu.memory_space<vmem>>, vector<32x128xf32>
    %c0_1 = arith.constant 0 : index
    %c0_2 = arith.constant 0 : index
    %c0_3 = arith.constant 0 : index
    %1 = vector.load %arg2[%c0_1, %c0_2, %c0_3] : memref<5x32x32xf32, #tpu.memory_space<vmem>>, vector<1x32x32xf32>
    %2 = vector.shape_cast %1 : vector<1x32x32xf32> to vector<32x32xf32>
    %cst = arith.constant dense<0.000000e+00> : vector<32x128xf32>
    %3 = tpu.matmul %2, %0, %cst {dimension_numbers = #tpu.dot_dimension_numbers<[1], [0], [0], [1], [0, 0, 1, 1], [], []>} : vector<32x32xf32>, vector<32x128xf32>, vector<32x128xf32> -> vector<32x128xf32>
    %c0_4 = arith.constant 0 : index
    %c0_5 = arith.constant 0 : index
    %c0_6 = arith.constant 0 : index
    %4 = vector.load %arg3[%c0_4, %c0_5, %c0_6] : memref<5x32x1xf32, #tpu.memory_space<vmem>>, vector<1x32x1xf32>
    %5 = vector.shape_cast %4 : vector<1x32x1xf32> to vector<32x1xf32>
    %6 = vector.broadcast %5 : vector<32x1xf32> to vector<32x128xf32>
    %7 = arith.addf %3, %6 : vector<32x128xf32>
    %8 = arith.negf %7 : vector<32x128xf32>
    %9 = math.exp %8 : vector<32x128xf32>
    %cst_7 = arith.constant 1.000000e+00 : f32
    %10 = vector.broadcast %cst_7 : f32 to vector<32x128xf32>
    %11 = arith.addf %10, %9 : vector<32x128xf32>
    %12 = arith.divf %10, %11 : vector<32x128xf32>
    %c1 = arith.constant 1 : index
    %c0_8 = arith.constant 0 : index
    %c0_9 = arith.constant 0 : index
    %13 = vector.load %arg2[%c1, %c0_8, %c0_9] : memref<5x32x32xf32, #tpu.memory_space<vmem>>, vector<1x32x32xf32>
    %14 = vector.shape_cast %13 : vector<1x32x32xf32> to vector<32x32xf32>
    %cst_10 = arith.constant dense<0.000000e+00> : vector<32x128xf32>
    %15 = tpu.matmul %14, %12, %cst_10 {dimension_numbers = #tpu.dot_dimension_numbers<[1], [0], [0], [1], [0, 0, 1, 1], [], []>} : vector<32x32xf32>, vector<32x128xf32>, vector<32x128xf32> -> vector<32x128xf32>
    %c1_11 = arith.constant 1 : index
    %c0_12 = arith.constant 0 : index
    %c0_13 = arith.constant 0 : index
    %16 = vector.load %arg3[%c1_11, %c0_12, %c0_13] : memref<5x32x1xf32, #tpu.memory_space<vmem>>, vector<1x32x1xf32>
    %17 = vector.shape_cast %16 : vector<1x32x1xf32> to vector<32x1xf32>
    %18 = vector.broadcast %17 : vector<32x1xf32> to vector<32x128xf32>
    %19 = arith.addf %15, %18 : vector<32x128xf32>
    %20 = arith.negf %19 : vector<32x128xf32>
    %21 = math.exp %20 : vector<32x128xf32>
    %cst_14 = arith.constant 1.000000e+00 : f32
    %22 = vector.broadcast %cst_14 : f32 to vector<32x128xf32>
    %23 = arith.addf %22, %21 : vector<32x128xf32>
    %24 = arith.divf %22, %23 : vector<32x128xf32>
    %c2 = arith.constant 2 : index
    %c0_15 = arith.constant 0 : index
    %c0_16 = arith.constant 0 : index
    %25 = vector.load %arg2[%c2, %c0_15, %c0_16] : memref<5x32x32xf32, #tpu.memory_space<vmem>>, vector<1x32x32xf32>
    %26 = vector.shape_cast %25 : vector<1x32x32xf32> to vector<32x32xf32>
    %cst_17 = arith.constant dense<0.000000e+00> : vector<32x128xf32>
    %27 = tpu.matmul %26, %24, %cst_17 {dimension_numbers = #tpu.dot_dimension_numbers<[1], [0], [0], [1], [0, 0, 1, 1], [], []>} : vector<32x32xf32>, vector<32x128xf32>, vector<32x128xf32> -> vector<32x128xf32>
    %c2_18 = arith.constant 2 : index
    %c0_19 = arith.constant 0 : index
    %c0_20 = arith.constant 0 : index
    %28 = vector.load %arg3[%c2_18, %c0_19, %c0_20] : memref<5x32x1xf32, #tpu.memory_space<vmem>>, vector<1x32x1xf32>
    %29 = vector.shape_cast %28 : vector<1x32x1xf32> to vector<32x1xf32>
    %30 = vector.broadcast %29 : vector<32x1xf32> to vector<32x128xf32>
    %31 = arith.addf %27, %30 : vector<32x128xf32>
    %32 = arith.negf %31 : vector<32x128xf32>
    %33 = math.exp %32 : vector<32x128xf32>
    %cst_21 = arith.constant 1.000000e+00 : f32
    %34 = vector.broadcast %cst_21 : f32 to vector<32x128xf32>
    %35 = arith.addf %34, %33 : vector<32x128xf32>
    %36 = arith.divf %34, %35 : vector<32x128xf32>
    %c3 = arith.constant 3 : index
    %c0_22 = arith.constant 0 : index
    %c0_23 = arith.constant 0 : index
    %37 = vector.load %arg2[%c3, %c0_22, %c0_23] : memref<5x32x32xf32, #tpu.memory_space<vmem>>, vector<1x32x32xf32>
    %38 = vector.shape_cast %37 : vector<1x32x32xf32> to vector<32x32xf32>
    %cst_24 = arith.constant dense<0.000000e+00> : vector<32x128xf32>
    %39 = tpu.matmul %38, %36, %cst_24 {dimension_numbers = #tpu.dot_dimension_numbers<[1], [0], [0], [1], [0, 0, 1, 1], [], []>} : vector<32x32xf32>, vector<32x128xf32>, vector<32x128xf32> -> vector<32x128xf32>
    %c3_25 = arith.constant 3 : index
    %c0_26 = arith.constant 0 : index
    %c0_27 = arith.constant 0 : index
    %40 = vector.load %arg3[%c3_25, %c0_26, %c0_27] : memref<5x32x1xf32, #tpu.memory_space<vmem>>, vector<1x32x1xf32>
    %41 = vector.shape_cast %40 : vector<1x32x1xf32> to vector<32x1xf32>
    %42 = vector.broadcast %41 : vector<32x1xf32> to vector<32x128xf32>
    %43 = arith.addf %39, %42 : vector<32x128xf32>
    %44 = arith.negf %43 : vector<32x128xf32>
    %45 = math.exp %44 : vector<32x128xf32>
    %cst_28 = arith.constant 1.000000e+00 : f32
    %46 = vector.broadcast %cst_28 : f32 to vector<32x128xf32>
    %47 = arith.addf %46, %45 : vector<32x128xf32>
    %48 = arith.divf %46, %47 : vector<32x128xf32>
    %c4 = arith.constant 4 : index
    %c0_29 = arith.constant 0 : index
    %c0_30 = arith.constant 0 : index
    %49 = vector.load %arg2[%c4, %c0_29, %c0_30] : memref<5x32x32xf32, #tpu.memory_space<vmem>>, vector<1x32x32xf32>
    %50 = vector.shape_cast %49 : vector<1x32x32xf32> to vector<32x32xf32>
    %cst_31 = arith.constant dense<0.000000e+00> : vector<32x128xf32>
    %51 = tpu.matmul %50, %48, %cst_31 {dimension_numbers = #tpu.dot_dimension_numbers<[1], [0], [0], [1], [0, 0, 1, 1], [], []>} : vector<32x32xf32>, vector<32x128xf32>, vector<32x128xf32> -> vector<32x128xf32>
    %c4_32 = arith.constant 4 : index
    %c0_33 = arith.constant 0 : index
    %c0_34 = arith.constant 0 : index
    %52 = vector.load %arg3[%c4_32, %c0_33, %c0_34] : memref<5x32x1xf32, #tpu.memory_space<vmem>>, vector<1x32x1xf32>
    %53 = vector.shape_cast %52 : vector<1x32x1xf32> to vector<32x1xf32>
    %54 = vector.broadcast %53 : vector<32x1xf32> to vector<32x128xf32>
    %55 = arith.addf %51, %54 : vector<32x128xf32>
    %56 = vector.extract_strided_slice %55 {offsets = [0, 0], sizes = [1, 128], strides = [1, 1]} : vector<32x128xf32> to vector<1x128xf32>
    %c0_35 = arith.constant 0 : index
    %c0_36 = arith.constant 0 : index
    %57 = vector.load %arg4[%c0_35, %c0_36] : memref<1x128xf32, #tpu.memory_space<vmem>>, vector<1x128xf32>
    tpu.vector_store %arg4[%c0_35, %c0_36], %56 {strides = array<i32>} : memref<1x128xf32, #tpu.memory_space<vmem>>, vector<1x128xf32>,
    return
  }
  func.func @transform_0(%arg0: i32) -> (i32, i32) {
    %c0_i32 = arith.constant 0 : i32
    %c0_i32_0 = arith.constant 0 : i32
    return %c0_i32, %arg0 : i32, i32
  }
  func.func @transform_1(%arg0: i32) -> (i32, i32, i32) {
    %c0_i32 = arith.constant 0 : i32
    %c0_i32_0 = arith.constant 0 : i32
    %c0_i32_1 = arith.constant 0 : i32
    %c0_i32_2 = arith.constant 0 : i32
    return %c0_i32, %c0_i32_0, %c0_i32_1 : i32, i32, i32
  }
  func.func @transform_2(%arg0: i32) -> (i32, i32, i32) {
    %c0_i32 = arith.constant 0 : i32
    %c0_i32_0 = arith.constant 0 : i32
    %c0_i32_1 = arith.constant 0 : i32
    %c0_i32_2 = arith.constant 0 : i32
    return %c0_i32, %c0_i32_0, %c0_i32_1 : i32, i32, i32
  }
  func.func @transform_3(%arg0: i32) -> (i32, i32) {
    %c0_i32 = arith.constant 0 : i32
    %c0_i32_0 = arith.constant 0 : i32
    return %c0_i32, %arg0 : i32, i32
  }
}

</mosaic_0001>

<llo_original>
// kernel: tpu_custom_call.1
$region0: #{tpu_custom_call.1}
  #allocation0 [shape = 'u32[]', space=smem, size = 0x4, offset = 0x4, fixed_abs, tag = 'smem constant byte address 0x4 - core index']
  #allocation1 [shape = 'u32[144,128]{1,0:T(1,128)}', space=vmem, size = 0x12000, scoped, tag = 'internal scratch']
  %s0 = inlined_call_operand.hbm [shape: f32[32,128], index: 0, kind: input, shape index: {}]
  %s1 = inlined_call_operand.vmem [shape: f32[5,32,32], index: 1, kind: input, shape index: {}]
  %s2 = inlined_call_operand.vmem [shape: f32[5,32,1], index: 2, kind: input, shape index: {}]
  %s3 = inlined_call_operand.hbm [shape: f32[1,128], index: 3, kind: output, shape index: {}]
  %s4 = sld [smem:[#allocation0]]
  $region26: #{tpu_custom_call.1} parent=0
    _
  %s6 = ssub.s32 1, %s4
  %s7 = scalar_select 0, %s6, %s4
  $region1: #{tpu_custom_call.1} parent=0
    #allocation2 [shape = 'u8[16384]{0}', space=vmem, size = 0x4000, scoped, tag = 'input window, operand 0, single buffered']
    #allocation3 [shape = 's32[1]{0}', space=sflag, size = 0x4, scoped, tag = 'scoped memory for tpu_custom_call.1']
    #allocation4 [shape = 's32[1]{0}', space=sflag, size = 0x4, scoped, tag = 'scoped memory for tpu_custom_call.1']
    #allocation5 [shape = 'u8[512]{0}', space=vmem, size = 0x400, scoped, tag = 'output window, operand 0, single buffered']
    %8 = vsyncpa [#allocation3], 0
    %9 = vsyncpa [#allocation4], 0
    // Predicated region
    $region2: #{tpu_custom_call.1} parent=1 // pred_check
      _
    $region3: #{tpu_custom_call.1} parent=1 // pred_check_branch
      %11 = sbr.rel (0) target = $region5
    $region4: #{tpu_custom_call.1} parent=1 // pred_region
      %s13 = ssub.s32 512, 512
      %14 = vsyncadd [#allocation3], %s13
      %s15 = sshll.u32 [#allocation2], 4
      %s16 = int_to_ptr.vmem [resolvable:$true] %s15
      %21 = dma.hbm_to_vmem [thread:$0]  %s0, 512, %s16, [#allocation3], 128, 128, 8
    $region5: #{tpu_custom_call.1} parent=1 // pred_fallthru
      _
    // Predicated region
    $region6: #{tpu_custom_call.1} parent=1 // pred_check
      _
    $region7: #{tpu_custom_call.1} parent=1 // pred_check_branch
      %23 = sbr.rel (0) target = $region9
    $region8: #{tpu_custom_call.1} parent=1 // pred_region
      _
    $region9: #{tpu_custom_call.1} parent=1 // pred_fallthru
      _
    // Predicated region
    $region10: #{tpu_custom_call.1} parent=1 // pred_check
      _
    $region11: #{tpu_custom_call.1} parent=1 // pred_check_branch
      %25 = sbr.rel (0) target = $region13
    $region12: #{tpu_custom_call.1} parent=1 // pred_region
      _
    $region13: #{tpu_custom_call.1} parent=1 // pred_fallthru
      _
    // Predicated region
    $region14: #{tpu_custom_call.1} parent=1 // pred_check
      _
    $region15: #{tpu_custom_call.1} parent=1 // pred_check_branch
      %27 = sbr.rel (0) target = $region17
    $region16: #{tpu_custom_call.1} parent=1 // pred_region
      %28 = dma.done [#allocation3], 512
    $region17: #{tpu_custom_call.1} parent=1 // pred_fallthru
      _
    %v29 = vld [vmem:[#allocation2] sm:$0xff]
    %v30 = vld [vmem:[#allocation2 + $0x8] sm:$0xff]
    %v31 = vld [vmem:[#allocation2 + $0x10] sm:$0xff]
    %v32 = vld [vmem:[#allocation2 + $0x18] sm:$0xff]
    %v33 = vld [vmem:[%s1] sm:$0xff]
    %v34 = vld [vmem:[%s1 + $0x8] sm:$0xff]
    %v35 = vld [vmem:[%s1 + $0x10] sm:$0xff]
    %v36 = vld [vmem:[%s1 + $0x18] sm:$0xff]
    %v37 = vld [vmem:[%s2] sm:$0xff]
    %v38 = vld [vmem:[%s2 + $0x8] sm:$0xff]
    %v39 = vld [vmem:[%s2 + $0x10] sm:$0xff]
    %v40 = vld [vmem:[%s2 + $0x18] sm:$0xff]
    %42 = vset.pattern.permute.xlu0 0
    %43 = vperm.xlu0 %42, %v37
    %v44 = vpop.permute.xlu0 %43
    %47 = vset.pattern.permute.xlu0 0
    %48 = vperm.xlu0 %47, %v38
    %v49 = vpop.permute.xlu0 %48
    %52 = vset.pattern.permute.xlu0 0
    %53 = vperm.xlu0 %52, %v39
    %v54 = vpop.permute.xlu0 %53
    %57 = vset.pattern.permute.xlu0 0
    %58 = vperm.xlu0 %57, %v40
    %v59 = vpop.permute.xlu0 %58
    %vm61 = vcmask 261120
    %v63 = vsel %vm61, %v33, 0
    %v66 = vsel %vm61, %v34, 0
    %v69 = vsel %vm61, %v35, 0
    %v72 = vsel %vm61, %v36, 0
    %74 = vmatprep.subr.mxu0 0.0
    %75 = vmatpush1.msra.mxu0 %v29
    %76 = vmatprep.subr.mxu0 0.0
    %77 = vmatpush1.msra.mxu0 %v30
    %78 = vmatprep.subr.mxu0 0.0
    %79 = vmatpush1.msra.mxu0 %v31
    %80 = vmatprep.subr.mxu0 0.0
    %81 = vmatpush1.msra.mxu0 %v32
    %82 = vmatprep.subr.mxu0 0.0
    %83 = vmatpush1.msra.mxu0 0.0
    %84 = vmatprep.subr.mxu0 0.0
    %85 = vmatpush1.msra.mxu0 0.0
    %86 = vmatprep.subr.mxu0 0.0
    %87 = vmatpush1.msra.mxu0 0.0
    %88 = vmatprep.subr.mxu0 0.0
    %89 = vmatpush1.msra.mxu0 0.0
    %90 = vmatprep.subr.mxu0 0.0
    %91 = vmatpush1.msra.mxu0 0.0
    %92 = vmatprep.subr.mxu0 0.0
    %93 = vmatpush1.msra.mxu0 0.0
    %94 = vmatprep.subr.mxu0 0.0
    %95 = vmatpush1.msra.mxu0 0.0
    %96 = vmatprep.subr.mxu0 0.0
    %97 = vmatpush1.msra.mxu0 0.0
    %98 = vmatprep.subr.mxu0 0.0
    %99 = vmatpush1.msra.mxu0 0.0
    %100 = vmatprep.subr.mxu0 0.0
    %101 = vmatpush1.msra.mxu0 0.0
    %102 = vmatprep.subr.mxu0 0.0
    %103 = vmatpush1.msra.mxu0 0.0
    %104 = vmatprep.subr.mxu0 0.0
    %105 = vmatpush1.msra.mxu0 0.0
    %106 = vmatprep.subr.mxu0 0.0
    %107 = vmatpush1.msra.mxu0 0.0
    %108 = vmatprep.subr.mxu0 0.0
    %109 = vmatpush1.msra.mxu0 0.0
    %110 = vmatprep.subr.mxu0 0.0
    %111 = vmatpush1.msra.mxu0 0.0
    %112 = vmatprep.subr.mxu0 0.0
    %113 = vmatpush1.msra.mxu0 0.0
    %114 = vmatprep.subr.mxu0 0.0
    %115 = vmatpush1.msra.mxu0 0.0
    %116 = vmatprep.subr.mxu0 0.0
    %117 = vmatpush1.msra.mxu0 0.0
    %118 = vmatprep.subr.mxu0 0.0
    %119 = vmatpush1.msra.mxu0 0.0
    %120 = vmatprep.subr.mxu0 0.0
    %121 = vmatpush1.msra.mxu0 0.0
    %122 = vmatprep.subr.mxu0 0.0
    %123 = vmatpush1.msra.mxu0 0.0
    %124 = vmatprep.subr.mxu0 0.0
    %125 = vmatpush1.msra.mxu0 0.0
    %126 = vmatprep.subr.mxu0 0.0
    %127 = vmatpush1.msra.mxu0 0.0
    %128 = vmatprep.subr.mxu0 0.0
    %129 = vmatpush1.msra.mxu0 0.0
    %130 = vmatprep.subr.mxu0 0.0
    %131 = vmatpush1.msra.mxu0 0.0
    %132 = vmatprep.subr.mxu0 0.0
    %133 = vmatpush1.msra.mxu0 0.0
    %134 = vmatprep.subr.mxu0 0.0
    %135 = vmatpush1.msra.mxu0 0.0
    %136 = vmatprep.subr.mxu0 0.0
    %137 = vmatpush1.msra.mxu0 0.0
    %138 = vmatprep.mubr.f32.mxu0 0.0
    %139 = vmatmul.mubr.f32.gmra.mrb[0].mxu0 %v63
    %v140 = vpop.f32.mrb[0].mxu0
    %v141 = vadd.f32 %v44, %v140
    %v142 = vpop.f32.mrb[0].mxu0
    %143 = vmatprep.mubr.f32.mxu0 0.0
    %144 = vmatmul.mubr.f32.gmra.mrb[0].mxu0 %v66
    %v145 = vpop.f32.mrb[0].mxu0
    %v146 = vadd.f32 %v49, %v145
    %v147 = vpop.f32.mrb[0].mxu0
    %148 = vmatprep.mubr.f32.mxu0 0.0
    %149 = vmatmul.mubr.f32.gmra.mrb[0].mxu0 %v69
    %v150 = vpop.f32.mrb[0].mxu0
    %v151 = vadd.f32 %v54, %v150
    %v152 = vpop.f32.mrb[0].mxu0
    %153 = vmatprep.mubr.f32.mxu0 0.0
    %154 = vmatmul.mubr.f32.gmra.mrb[0].mxu0 %v72
    %v155 = vpop.f32.mrb[0].mxu0
    %v156 = vadd.f32 %v59, %v155
    %v157 = vpop.f32.mrb[0].mxu0
    %158 = vdwg.mxu0
    %v159 = vxor.u32 %v141, 2147483648
    %v160 = vxor.u32 %v146, 2147483648
    %v161 = vxor.u32 %v151, 2147483648
    %v162 = vxor.u32 %v156, 2147483648
    %v163 = vmul.f32 %v159, 1.442695
    %v164 = vpow.pop %v163
    %v165 = vmul.f32 %v160, 1.442695
    %v166 = vpow.pop %v165
    %v167 = vmul.f32 %v161, 1.442695
    %v168 = vpow.pop %v167
    %v169 = vmul.f32 %v162, 1.442695
    %v170 = vpow.pop %v169
    %v171 = vadd.f32 %v164, 1.0
    %v172 = vadd.f32 %v166, 1.0
    %v173 = vadd.f32 %v168, 1.0
    %v174 = vadd.f32 %v170, 1.0
    %v175 = vrcp.pop %v171
    %v176 = vmul.f32 1.0, %v175
    %v177 = vrcp.pop %v172
    %v178 = vmul.f32 1.0, %v177
    %v179 = vrcp.pop %v173
    %v180 = vmul.f32 1.0, %v179
    %v181 = vrcp.pop %v174
    %v182 = vmul.f32 1.0, %v181
    %s183 = scalar_lea.vmem %s1, 32
    %v184 = vld [vmem:[%s183] sm:$0xff]
    %v185 = vld [vmem:[%s183 + $0x8] sm:$0xff]
    %v186 = vld [vmem:[%s183 + $0x10] sm:$0xff]
    %v187 = vld [vmem:[%s183 + $0x18] sm:$0xff]
    %s188 = scalar_lea.vmem %s2, 32
    %v189 = vld [vmem:[%s188] sm:$0xff]
    %v190 = vld [vmem:[%s188 + $0x8] sm:$0xff]
    %v191 = vld [vmem:[%s188 + $0x10] sm:$0xff]
    %v192 = vld [vmem:[%s188 + $0x18] sm:$0xff]
    %194 = vset.pattern.permute.xlu0 0
    %195 = vperm.xlu0 %194, %v189
    %v196 = vpop.permute.xlu0 %195
    %199 = vset.pattern.permute.xlu0 0
    %200 = vperm.xlu0 %199, %v190
    %v201 = vpop.permute.xlu0 %200
    %204 = vset.pattern.permute.xlu0 0
    %205 = vperm.xlu0 %204, %v191
    %v206 = vpop.permute.xlu0 %205
    %209 = vset.pattern.permute.xlu0 0
    %210 = vperm.xlu0 %209, %v192
    %v211 = vpop.permute.xlu0 %210
    %v214 = vsel %vm61, %v184, 0
    %v217 = vsel %vm61, %v185, 0
    %v220 = vsel %vm61, %v186, 0
    %v223 = vsel %vm61, %v187, 0
    %225 = vmatprep.subr.mxu0 0.0
    %226 = vmatpush1.msra.mxu0 %v176
    %227 = vmatprep.subr.mxu0 0.0
    %228 = vmatpush1.msra.mxu0 %v178
    %229 = vmatprep.subr.mxu0 0.0
    %230 = vmatpush1.msra.mxu0 %v180
    %231 = vmatprep.subr.mxu0 0.0
    %232 = vmatpush1.msra.mxu0 %v182
    %233 = vmatprep.subr.mxu0 0.0
    %234 = vmatpush1.msra.mxu0 0.0
    %235 = vmatprep.subr.mxu0 0.0
    %236 = vmatpush1.msra.mxu0 0.0
    %237 = vmatprep.subr.mxu0 0.0
    %238 = vmatpush1.msra.mxu0 0.0
    %239 = vmatprep.subr.mxu0 0.0
    %240 = vmatpush1.msra.mxu0 0.0
    %241 = vmatprep.subr.mxu0 0.0
    %242 = vmatpush1.msra.mxu0 0.0
    %243 = vmatprep.subr.mxu0 0.0
    %244 = vmatpush1.msra.mxu0 0.0
    %245 = vmatprep.subr.mxu0 0.0
    %246 = vmatpush1.msra.mxu0 0.0
    %247 = vmatprep.subr.mxu0 0.0
    %248 = vmatpush1.msra.mxu0 0.0
    %249 = vmatprep.subr.mxu0 0.0
    %250 = vmatpush1.msra.mxu0 0.0
    %251 = vmatprep.subr.mxu0 0.0
    %252 = vmatpush1.msra.mxu0 0.0
    %253 = vmatprep.subr.mxu0 0.0
    %254 = vmatpush1.msra.mxu0 0.0
    %255 = vmatprep.subr.mxu0 0.0
    %256 = vmatpush1.msra.mxu0 0.0
    %257 = vmatprep.subr.mxu0 0.0
    %258 = vmatpush1.msra.mxu0 0.0
    %259 = vmatprep.subr.mxu0 0.0
    %260 = vmatpush1.msra.mxu0 0.0
    %261 = vmatprep.subr.mxu0 0.0
    %262 = vmatpush1.msra.mxu0 0.0
    %263 = vmatprep.subr.mxu0 0.0
    %264 = vmatpush1.msra.mxu0 0.0
    %265 = vmatprep.subr.mxu0 0.0
    %266 = vmatpush1.msra.mxu0 0.0
    %267 = vmatprep.subr.mxu0 0.0
    %268 = vmatpush1.msra.mxu0 0.0
    %269 = vmatprep.subr.mxu0 0.0
    %270 = vmatpush1.msra.mxu0 0.0
    %271 = vmatprep.subr.mxu0 0.0
    %272 = vmatpush1.msra.mxu0 0.0
    %273 = vmatprep.subr.mxu0 0.0
    %274 = vmatpush1.msra.mxu0 0.0
    %275 = vmatprep.subr.mxu0 0.0
    %276 = vmatpush1.msra.mxu0 0.0
    %277 = vmatprep.subr.mxu0 0.0
    %278 = vmatpush1.msra.mxu0 0.0
    %279 = vmatprep.subr.mxu0 0.0
    %280 = vmatpush1.msra.mxu0 0.0
    %281 = vmatprep.subr.mxu0 0.0
    %282 = vmatpush1.msra.mxu0 0.0
    %283 = vmatprep.subr.mxu0 0.0
    %284 = vmatpush1.msra.mxu0 0.0
    %285 = vmatprep.subr.mxu0 0.0
    %286 = vmatpush1.msra.mxu0 0.0
    %287 = vmatprep.subr.mxu0 0.0
    %288 = vmatpush1.msra.mxu0 0.0
    %289 = vmatprep.mubr.f32.mxu0 0.0
    %290 = vmatmul.mubr.f32.gmra.mrb[0].mxu0 %v214
    %v291 = vpop.f32.mrb[0].mxu0
    %v292 = vadd.f32 %v196, %v291
    %v293 = vpop.f32.mrb[0].mxu0
    %294 = vmatprep.mubr.f32.mxu0 0.0
    %295 = vmatmul.mubr.f32.gmra.mrb[0].mxu0 %v217
    %v296 = vpop.f32.mrb[0].mxu0
    %v297 = vadd.f32 %v201, %v296
    %v298 = vpop.f32.mrb[0].mxu0
    %299 = vmatprep.mubr.f32.mxu0 0.0
    %300 = vmatmul.mubr.f32.gmra.mrb[0].mxu0 %v220
    %v301 = vpop.f32.mrb[0].mxu0
    %v302 = vadd.f32 %v206, %v301
    %v303 = vpop.f32.mrb[0].mxu0
    %304 = vmatprep.mubr.f32.mxu0 0.0
    %305 = vmatmul.mubr.f32.gmra.mrb[0].mxu0 %v223
    %v306 = vpop.f32.mrb[0].mxu0
    %v307 = vadd.f32 %v211, %v306
    %v308 = vpop.f32.mrb[0].mxu0
    %309 = vdwg.mxu0
    %v310 = vxor.u32 %v292, 2147483648
    %v311 = vxor.u32 %v297, 2147483648
    %v312 = vxor.u32 %v302, 2147483648
    %v313 = vxor.u32 %v307, 2147483648
    %v314 = vmul.f32 %v310, 1.442695
    %v315 = vpow.pop %v314
    %v316 = vmul.f32 %v311, 1.442695
    %v317 = vpow.pop %v316
    %v318 = vmul.f32 %v312, 1.442695
    %v319 = vpow.pop %v318
    %v320 = vmul.f32 %v313, 1.442695
    %v321 = vpow.pop %v320
    %v322 = vadd.f32 %v315, 1.0
    %v323 = vadd.f32 %v317, 1.0
    %v324 = vadd.f32 %v319, 1.0
    %v325 = vadd.f32 %v321, 1.0
    %v326 = vrcp.pop %v322
    %v327 = vmul.f32 1.0, %v326
    %v328 = vrcp.pop %v323
    %v329 = vmul.f32 1.0, %v328
    %v330 = vrcp.pop %v324
    %v331 = vmul.f32 1.0, %v330
    %v332 = vrcp.pop %v325
    %v333 = vmul.f32 1.0, %v332
    %s334 = scalar_lea.vmem %s1, 64
    %v335 = vld [vmem:[%s334] sm:$0xff]
    %v336 = vld [vmem:[%s334 + $0x8] sm:$0xff]
    %v337 = vld [vmem:[%s334 + $0x10] sm:$0xff]
    %v338 = vld [vmem:[%s334 + $0x18] sm:$0xff]
    %s339 = scalar_lea.vmem %s2, 64
    %v340 = vld [vmem:[%s339] sm:$0xff]
    %v341 = vld [vmem:[%s339 + $0x8] sm:$0xff]
    %v342 = vld [vmem:[%s339 + $0x10] sm:$0xff]
    %v343 = vld [vmem:[%s339 + $0x18] sm:$0xff]
    %345 = vset.pattern.permute.xlu0 0
    %346 = vperm.xlu0 %345, %v340
    %v347 = vpop.permute.xlu0 %346
    %350 = vset.pattern.permute.xlu0 0
    %351 = vperm.xlu0 %350, %v341
    %v352 = vpop.permute.xlu0 %351
    %355 = vset.pattern.permute.xlu0 0
    %356 = vperm.xlu0 %355, %v342
    %v357 = vpop.permute.xlu0 %356
    %360 = vset.pattern.permute.xlu0 0
    %361 = vperm.xlu0 %360, %v343
    %v362 = vpop.permute.xlu0 %361
    %v365 = vsel %vm61, %v335, 0
    %v368 = vsel %vm61, %v336, 0
    %v371 = vsel %vm61, %v337, 0
    %v374 = vsel %vm61, %v338, 0
    %376 = vmatprep.subr.mxu0 0.0
    %377 = vmatpush1.msra.mxu0 %v327
    %378 = vmatprep.subr.mxu0 0.0
    %379 = vmatpush1.msra.mxu0 %v329
    %380 = vmatprep.subr.mxu0 0.0
    %381 = vmatpush1.msra.mxu0 %v331
    %382 = vmatprep.subr.mxu0 0.0
    %383 = vmatpush1.msra.mxu0 %v333
    %384 = vmatprep.subr.mxu0 0.0
    %385 = vmatpush1.msra.mxu0 0.0
    %386 = vmatprep.subr.mxu0 0.0
    %387 = vmatpush1.msra.mxu0 0.0
    %388 = vmatprep.subr.mxu0 0.0
    %389 = vmatpush1.msra.mxu0 0.0
    %390 = vmatprep.subr.mxu0 0.0
    %391 = vmatpush1.msra.mxu0 0.0
    %392 = vmatprep.subr.mxu0 0.0
    %393 = vmatpush1.msra.mxu0 0.0
    %394 = vmatprep.subr.mxu0 0.0
    %395 = vmatpush1.msra.mxu0 0.0
    %396 = vmatprep.subr.mxu0 0.0
    %397 = vmatpush1.msra.mxu0 0.0
    %398 = vmatprep.subr.mxu0 0.0
    %399 = vmatpush1.msra.mxu0 0.0
    %400 = vmatprep.subr.mxu0 0.0
    %401 = vmatpush1.msra.mxu0 0.0
    %402 = vmatprep.subr.mxu0 0.0
    %403 = vmatpush1.msra.mxu0 0.0
    %404 = vmatprep.subr.mxu0 0.0
    %405 = vmatpush1.msra.mxu0 0.0
    %406 = vmatprep.subr.mxu0 0.0
    %407 = vmatpush1.msra.mxu0 0.0
    %408 = vmatprep.subr.mxu0 0.0
    %409 = vmatpush1.msra.mxu0 0.0
    %410 = vmatprep.subr.mxu0 0.0
    %411 = vmatpush1.msra.mxu0 0.0
    %412 = vmatprep.subr.mxu0 0.0
    %413 = vmatpush1.msra.mxu0 0.0
    %414 = vmatprep.subr.mxu0 0.0
    %415 = vmatpush1.msra.mxu0 0.0
    %416 = vmatprep.subr.mxu0 0.0
    %417 = vmatpush1.msra.mxu0 0.0
    %418 = vmatprep.subr.mxu0 0.0
    %419 = vmatpush1.msra.mxu0 0.0
    %420 = vmatprep.subr.mxu0 0.0
    %421 = vmatpush1.msra.mxu0 0.0
    %422 = vmatprep.subr.mxu0 0.0
    %423 = vmatpush1.msra.mxu0 0.0
    %424 = vmatprep.subr.mxu0 0.0
    %425 = vmatpush1.msra.mxu0 0.0
    %426 = vmatprep.subr.mxu0 0.0
    %427 = vmatpush1.msra.mxu0 0.0
    %428 = vmatprep.subr.mxu0 0.0
    %429 = vmatpush1.msra.mxu0 0.0
    %430 = vmatprep.subr.mxu0 0.0
    %431 = vmatpush1.msra.mxu0 0.0
    %432 = vmatprep.subr.mxu0 0.0
    %433 = vmatpush1.msra.mxu0 0.0
    %434 = vmatprep.subr.mxu0 0.0
    %435 = vmatpush1.msra.mxu0 0.0
    %436 = vmatprep.subr.mxu0 0.0
    %437 = vmatpush1.msra.mxu0 0.0
    %438 = vmatprep.subr.mxu0 0.0
    %439 = vmatpush1.msra.mxu0 0.0
    %440 = vmatprep.mubr.f32.mxu0 0.0
    %441 = vmatmul.mubr.f32.gmra.mrb[0].mxu0 %v365
    %v442 = vpop.f32.mrb[0].mxu0
    %v443 = vadd.f32 %v347, %v442
    %v444 = vpop.f32.mrb[0].mxu0
    %445 = vmatprep.mubr.f32.mxu0 0.0
    %446 = vmatmul.mubr.f32.gmra.mrb[0].mxu0 %v368
    %v447 = vpop.f32.mrb[0].mxu0
    %v448 = vadd.f32 %v352, %v447
    %v449 = vpop.f32.mrb[0].mxu0
    %450 = vmatprep.mubr.f32.mxu0 0.0
    %451 = vmatmul.mubr.f32.gmra.mrb[0].mxu0 %v371
    %v452 = vpop.f32.mrb[0].mxu0
    %v453 = vadd.f32 %v357, %v452
    %v454 = vpop.f32.mrb[0].mxu0
    %455 = vmatprep.mubr.f32.mxu0 0.0
    %456 = vmatmul.mubr.f32.gmra.mrb[0].mxu0 %v374
    %v457 = vpop.f32.mrb[0].mxu0
    %v458 = vadd.f32 %v362, %v457
    %v459 = vpop.f32.mrb[0].mxu0
    %460 = vdwg.mxu0
    %v461 = vxor.u32 %v443, 2147483648
    %v462 = vxor.u32 %v448, 2147483648
    %v463 = vxor.u32 %v453, 2147483648
    %v464 = vxor.u32 %v458, 2147483648
    %v465 = vmul.f32 %v461, 1.442695
    %v466 = vpow.pop %v465
    %v467 = vmul.f32 %v462, 1.442695
    %v468 = vpow.pop %v467
    %v469 = vmul.f32 %v463, 1.442695
    %v470 = vpow.pop %v469
    %v471 = vmul.f32 %v464, 1.442695
    %v472 = vpow.pop %v471
    %v473 = vadd.f32 %v466, 1.0
    %v474 = vadd.f32 %v468, 1.0
    %v475 = vadd.f32 %v470, 1.0
    %v476 = vadd.f32 %v472, 1.0
    %v477 = vrcp.pop %v473
    %v478 = vmul.f32 1.0, %v477
    %v479 = vrcp.pop %v474
    %v480 = vmul.f32 1.0, %v479
    %v481 = vrcp.pop %v475
    %v482 = vmul.f32 1.0, %v481
    %v483 = vrcp.pop %v476
    %v484 = vmul.f32 1.0, %v483
    %s485 = scalar_lea.vmem %s1, 96
    %v486 = vld [vmem:[%s485] sm:$0xff]
    %v487 = vld [vmem:[%s485 + $0x8] sm:$0xff]
    %v488 = vld [vmem:[%s485 + $0x10] sm:$0xff]
    %v489 = vld [vmem:[%s485 + $0x18] sm:$0xff]
    %s490 = scalar_lea.vmem %s2, 96
    %v491 = vld [vmem:[%s490] sm:$0xff]
    %v492 = vld [vmem:[%s490 + $0x8] sm:$0xff]
    %v493 = vld [vmem:[%s490 + $0x10] sm:$0xff]
    %v494 = vld [vmem:[%s490 + $0x18] sm:$0xff]
    %496 = vset.pattern.permute.xlu0 0
    %497 = vperm.xlu0 %496, %v491
    %v498 = vpop.permute.xlu0 %497
    %501 = vset.pattern.permute.xlu0 0
    %502 = vperm.xlu0 %501, %v492
    %v503 = vpop.permute.xlu0 %502
    %506 = vset.pattern.permute.xlu0 0
    %507 = vperm.xlu0 %506, %v493
    %v508 = vpop.permute.xlu0 %507
    %511 = vset.pattern.permute.xlu0 0
    %512 = vperm.xlu0 %511, %v494
    %v513 = vpop.permute.xlu0 %512
    %v516 = vsel %vm61, %v486, 0
    %v519 = vsel %vm61, %v487, 0
    %v522 = vsel %vm61, %v488, 0
    %v525 = vsel %vm61, %v489, 0
    %527 = vmatprep.subr.mxu0 0.0
    %528 = vmatpush1.msra.mxu0 %v478
    %529 = vmatprep.subr.mxu0 0.0
    %530 = vmatpush1.msra.mxu0 %v480
    %531 = vmatprep.subr.mxu0 0.0
    %532 = vmatpush1.msra.mxu0 %v482
    %533 = vmatprep.subr.mxu0 0.0
    %534 = vmatpush1.msra.mxu0 %v484
    %535 = vmatprep.subr.mxu0 0.0
    %536 = vmatpush1.msra.mxu0 0.0
    %537 = vmatprep.subr.mxu0 0.0
    %538 = vmatpush1.msra.mxu0 0.0
    %539 = vmatprep.subr.mxu0 0.0
    %540 = vmatpush1.msra.mxu0 0.0
    %541 = vmatprep.subr.mxu0 0.0
    %542 = vmatpush1.msra.mxu0 0.0
    %543 = vmatprep.subr.mxu0 0.0
    %544 = vmatpush1.msra.mxu0 0.0
    %545 = vmatprep.subr.mxu0 0.0
    %546 = vmatpush1.msra.mxu0 0.0
    %547 = vmatprep.subr.mxu0 0.0
    %548 = vmatpush1.msra.mxu0 0.0
    %549 = vmatprep.subr.mxu0 0.0
    %550 = vmatpush1.msra.mxu0 0.0
    %551 = vmatprep.subr.mxu0 0.0
    %552 = vmatpush1.msra.mxu0 0.0
    %553 = vmatprep.subr.mxu0 0.0
    %554 = vmatpush1.msra.mxu0 0.0
    %555 = vmatprep.subr.mxu0 0.0
    %556 = vmatpush1.msra.mxu0 0.0
    %557 = vmatprep.subr.mxu0 0.0
    %558 = vmatpush1.msra.mxu0 0.0
    %559 = vmatprep.subr.mxu0 0.0
    %560 = vmatpush1.msra.mxu0 0.0
    %561 = vmatprep.subr.mxu0 0.0
    %562 = vmatpush1.msra.mxu0 0.0
    %563 = vmatprep.subr.mxu0 0.0
    %564 = vmatpush1.msra.mxu0 0.0
    %565 = vmatprep.subr.mxu0 0.0
    %566 = vmatpush1.msra.mxu0 0.0
    %567 = vmatprep.subr.mxu0 0.0
    %568 = vmatpush1.msra.mxu0 0.0
    %569 = vmatprep.subr.mxu0 0.0
    %570 = vmatpush1.msra.mxu0 0.0
    %571 = vmatprep.subr.mxu0 0.0
    %572 = vmatpush1.msra.mxu0 0.0
    %573 = vmatprep.subr.mxu0 0.0
    %574 = vmatpush1.msra.mxu0 0.0
    %575 = vmatprep.subr.mxu0 0.0
    %576 = vmatpush1.msra.mxu0 0.0
    %577 = vmatprep.subr.mxu0 0.0
    %578 = vmatpush1.msra.mxu0 0.0
    %579 = vmatprep.subr.mxu0 0.0
    %580 = vmatpush1.msra.mxu0 0.0
    %581 = vmatprep.subr.mxu0 0.0
    %582 = vmatpush1.msra.mxu0 0.0
    %583 = vmatprep.subr.mxu0 0.0
    %584 = vmatpush1.msra.mxu0 0.0
    %585 = vmatprep.subr.mxu0 0.0
    %586 = vmatpush1.msra.mxu0 0.0
    %587 = vmatprep.subr.mxu0 0.0
    %588 = vmatpush1.msra.mxu0 0.0
    %589 = vmatprep.subr.mxu0 0.0
    %590 = vmatpush1.msra.mxu0 0.0
    %591 = vmatprep.mubr.f32.mxu0 0.0
    %592 = vmatmul.mubr.f32.gmra.mrb[0].mxu0 %v516
    %v593 = vpop.f32.mrb[0].mxu0
    %v594 = vadd.f32 %v498, %v593
    %v595 = vpop.f32.mrb[0].mxu0
    %596 = vmatprep.mubr.f32.mxu0 0.0
    %597 = vmatmul.mubr.f32.gmra.mrb[0].mxu0 %v519
    %v598 = vpop.f32.mrb[0].mxu0
    %v599 = vadd.f32 %v503, %v598
    %v600 = vpop.f32.mrb[0].mxu0
    %601 = vmatprep.mubr.f32.mxu0 0.0
    %602 = vmatmul.mubr.f32.gmra.mrb[0].mxu0 %v522
    %v603 = vpop.f32.mrb[0].mxu0
    %v604 = vadd.f32 %v508, %v603
    %v605 = vpop.f32.mrb[0].mxu0
    %606 = vmatprep.mubr.f32.mxu0 0.0
    %607 = vmatmul.mubr.f32.gmra.mrb[0].mxu0 %v525
    %v608 = vpop.f32.mrb[0].mxu0
    %v609 = vadd.f32 %v513, %v608
    %v610 = vpop.f32.mrb[0].mxu0
    %611 = vdwg.mxu0
    %v612 = vxor.u32 %v594, 2147483648
    %v613 = vxor.u32 %v599, 2147483648
    %v614 = vxor.u32 %v604, 2147483648
    %v615 = vxor.u32 %v609, 2147483648
    %v616 = vmul.f32 %v612, 1.442695
    %v617 = vpow.pop %v616
    %v618 = vmul.f32 %v613, 1.442695
    %v619 = vpow.pop %v618
    %v620 = vmul.f32 %v614, 1.442695
    %v621 = vpow.pop %v620
    %v622 = vmul.f32 %v615, 1.442695
    %v623 = vpow.pop %v622
    %v624 = vadd.f32 %v617, 1.0
    %v625 = vadd.f32 %v619, 1.0
    %v626 = vadd.f32 %v621, 1.0
    %v627 = vadd.f32 %v623, 1.0
    %v628 = vrcp.pop %v624
    %v629 = vmul.f32 1.0, %v628
    %v630 = vrcp.pop %v625
    %v631 = vmul.f32 1.0, %v630
    %v632 = vrcp.pop %v626
    %v633 = vmul.f32 1.0, %v632
    %v634 = vrcp.pop %v627
    %v635 = vmul.f32 1.0, %v634
    %s636 = scalar_lea.vmem %s1, 128
    %v637 = vld [vmem:[%s636] sm:$0xff]
    %v638 = vld [vmem:[%s636 + $0x8] sm:$0xff]
    %v639 = vld [vmem:[%s636 + $0x10] sm:$0xff]
    %v640 = vld [vmem:[%s636 + $0x18] sm:$0xff]
    %s641 = scalar_lea.vmem %s2, 128
    %v642 = vld [vmem:[%s641] sm:$0xff]
    %v643 = vld [vmem:[%s641 + $0x8] sm:$0xff]
    %v644 = vld [vmem:[%s641 + $0x10] sm:$0xff]
    %v645 = vld [vmem:[%s641 + $0x18] sm:$0xff]
    %647 = vset.pattern.permute.xlu0 0
    %648 = vperm.xlu0 %647, %v642
    %v649 = vpop.permute.xlu0 %648
    %652 = vset.pattern.permute.xlu0 0
    %653 = vperm.xlu0 %652, %v643
    %v654 = vpop.permute.xlu0 %653
    %656 = vset.pattern.permute.xlu0 0
    %657 = vperm.xlu0 %656, %v644
    %v658 = vpop.permute.xlu0 %657
    %660 = vset.pattern.permute.xlu0 0
    %661 = vperm.xlu0 %660, %v645
    %v662 = vpop.permute.xlu0 %661
    %v664 = vsel %vm61, %v637, 0
    %v667 = vsel %vm61, %v638, 0
    %v670 = vsel %vm61, %v639, 0
    %v673 = vsel %vm61, %v640, 0
    %675 = vmatprep.subr.mxu0 0.0
    %676 = vmatpush1.msra.mxu0 %v629
    %677 = vmatprep.subr.mxu0 0.0
    %678 = vmatpush1.msra.mxu0 %v631
    %679 = vmatprep.subr.mxu0 0.0
    %680 = vmatpush1.msra.mxu0 %v633
    %681 = vmatprep.subr.mxu0 0.0
    %682 = vmatpush1.msra.mxu0 %v635
    %683 = vmatprep.subr.mxu0 0.0
    %684 = vmatpush1.msra.mxu0 0.0
    %685 = vmatprep.subr.mxu0 0.0
    %686 = vmatpush1.msra.mxu0 0.0
    %687 = vmatprep.subr.mxu0 0.0
    %688 = vmatpush1.msra.mxu0 0.0
    %689 = vmatprep.subr.mxu0 0.0
    %690 = vmatpush1.msra.mxu0 0.0
    %691 = vmatprep.subr.mxu0 0.0
    %692 = vmatpush1.msra.mxu0 0.0
    %693 = vmatprep.subr.mxu0 0.0
    %694 = vmatpush1.msra.mxu0 0.0
    %695 = vmatprep.subr.mxu0 0.0
    %696 = vmatpush1.msra.mxu0 0.0
    %697 = vmatprep.subr.mxu0 0.0
    %698 = vmatpush1.msra.mxu0 0.0
    %699 = vmatprep.subr.mxu0 0.0
    %700 = vmatpush1.msra.mxu0 0.0
    %701 = vmatprep.subr.mxu0 0.0
    %702 = vmatpush1.msra.mxu0 0.0
    %703 = vmatprep.subr.mxu0 0.0
    %704 = vmatpush1.msra.mxu0 0.0
    %705 = vmatprep.subr.mxu0 0.0
    %706 = vmatpush1.msra.mxu0 0.0
    %707 = vmatprep.subr.mxu0 0.0
    %708 = vmatpush1.msra.mxu0 0.0
    %709 = vmatprep.subr.mxu0 0.0
    %710 = vmatpush1.msra.mxu0 0.0
    %711 = vmatprep.subr.mxu0 0.0
    %712 = vmatpush1.msra.mxu0 0.0
    %713 = vmatprep.subr.mxu0 0.0
    %714 = vmatpush1.msra.mxu0 0.0
    %715 = vmatprep.subr.mxu0 0.0
    %716 = vmatpush1.msra.mxu0 0.0
    %717 = vmatprep.subr.mxu0 0.0
    %718 = vmatpush1.msra.mxu0 0.0
    %719 = vmatprep.subr.mxu0 0.0
    %720 = vmatpush1.msra.mxu0 0.0
    %721 = vmatprep.subr.mxu0 0.0
    %722 = vmatpush1.msra.mxu0 0.0
    %723 = vmatprep.subr.mxu0 0.0
    %724 = vmatpush1.msra.mxu0 0.0
    %725 = vmatprep.subr.mxu0 0.0
    %726 = vmatpush1.msra.mxu0 0.0
    %727 = vmatprep.subr.mxu0 0.0
    %728 = vmatpush1.msra.mxu0 0.0
    %729 = vmatprep.subr.mxu0 0.0
    %730 = vmatpush1.msra.mxu0 0.0
    %731 = vmatprep.subr.mxu0 0.0
    %732 = vmatpush1.msra.mxu0 0.0
    %733 = vmatprep.subr.mxu0 0.0
    %734 = vmatpush1.msra.mxu0 0.0
    %735 = vmatprep.subr.mxu0 0.0
    %736 = vmatpush1.msra.mxu0 0.0
    %737 = vmatprep.subr.mxu0 0.0
    %738 = vmatpush1.msra.mxu0 0.0
    %739 = vmatprep.mubr.f32.mxu0 0.0
    %740 = vmatmul.mubr.f32.gmra.mrb[0].mxu0 %v664
    %v741 = vpop.f32.mrb[0].mxu0
    %v742 = vadd.f32 %v649, %v741
    %v743 = vpop.f32.mrb[0].mxu0
    %744 = vmatprep.mubr.f32.mxu0 0.0
    %745 = vmatmul.mubr.f32.gmra.mrb[0].mxu0 %v667
    %v746 = vpop.f32.mrb[0].mxu0
    %v747 = vpop.f32.mrb[0].mxu0
    %748 = vmatprep.mubr.f32.mxu0 0.0
    %749 = vmatmul.mubr.f32.gmra.mrb[0].mxu0 %v670
    %v750 = vpop.f32.mrb[0].mxu0
    %v751 = vpop.f32.mrb[0].mxu0
    %752 = vmatprep.mubr.f32.mxu0 0.0
    %753 = vmatmul.mubr.f32.gmra.mrb[0].mxu0 %v673
    %v754 = vpop.f32.mrb[0].mxu0
    %v755 = vpop.f32.mrb[0].mxu0
    %756 = vdwg.mxu0
    %757 = vst [vmem:[#allocation5] sm:$0x1] %v742
    // Predicated region
    $region18: #{tpu_custom_call.1} parent=1 // pred_check
      _
    $region19: #{tpu_custom_call.1} parent=1 // pred_check_branch
      %759 = sbr.rel (0) target = $region21
    $region20: #{tpu_custom_call.1} parent=1 // pred_region
      %s761 = ssub.s32 16, 16
      %762 = vsyncadd [#allocation4], %s761
      %s764 = sshll.u32 [#allocation5], 4
      %s765 = int_to_ptr.vmem [resolvable:$true] %s764
      %767 = dma.vmem_to_hbm [thread:$0]  %s765, 16, %s3, [#allocation4]
    $region21: #{tpu_custom_call.1} parent=1 // pred_fallthru
      _
    // Predicated region
    $region22: #{tpu_custom_call.1} parent=1 // pred_check
      _
    $region23: #{tpu_custom_call.1} parent=1 // pred_check_branch
      %769 = sbr.rel (0) target = $region25
    $region24: #{tpu_custom_call.1} parent=1 // pred_region
      %770 = dma.done [#allocation4], 16
    $region25: #{tpu_custom_call.1} parent=1 // pred_fallthru
      _
    %771 = vsyncpa [#allocation3], 1
    %772 = vsyncpa [#allocation4], 1

</llo_original>
